<compile_context>
chip_gen: v6e
topology: v6e:2x2x1
jax: 0.10.0
libtpu: 0.0.40
codegen_flags: <defaults>
</compile_context>

<pallas_src>
import jax
import jax.numpy as jnp
from jax import lax
from jax.experimental import pallas as pl
from jax.experimental.pallas import tpu as pltpu


def _sigmoid_via_tanh(x):
    # sigmoid(x) == 0.5 * (tanh(x/2) + 1): one EUP push instead of exp + divide.
    return 0.5 * (jnp.tanh(0.5 * x) + 1.0)


def _lstm_recurrence_kernel(xw_ref, whh_ref, wfc_ref, bfc_ref, out_ref, h_sc, c_sc):
    """One grid step = (one batch block) x (one time chunk).

    xw_ref:  (CH, BB, 4H) time-major pre-projected gates x@W_ih^T + (b_ih+b_hh),
             gate columns permuted to (i, f, o, g).
    whh_ref: (H, 4H)  W_hh^T with the same column permutation (resident).
    wfc_ref: (1, H)   fc weight row.     bfc_ref: (1, 1) fc bias.
    out_ref: (BB, 1)  sigmoid(fc(h_last)), written on the last time chunk.
    h_sc/c_sc: (BB, H) recurrent state carried across time chunks.
    """
    c_idx = pl.program_id(1)                 # time-chunk index (sequential axis)
    CH = xw_ref.shape[0]
    H = h_sc.shape[-1]

    @pl.when(c_idx == 0)
    def _():
        h_sc[...] = jnp.zeros_like(h_sc)
        c_sc[...] = jnp.zeros_like(c_sc)

    whh = whh_ref[...]                       # (H, 4H), stays resident in vregs/VMEM

    def step(t, carry):
        h, c = carry
        # Contiguous leading-dim slab load + one small MXU matmul per step.
        gates = xw_ref[t] + jnp.dot(h.astype(whh.dtype), whh,
                                    preferred_element_type=jnp.float32)
        act = _sigmoid_via_tanh(gates[:, :3 * H])      # i, f, o in one EUP slab
        i_g = act[:, 0 * H:1 * H]
        f_g = act[:, 1 * H:2 * H]
        o_g = act[:, 2 * H:3 * H]
        g_g = jnp.tanh(gates[:, 3 * H:4 * H])
        c_new = f_g * c + i_g * g_g
        h_new = o_g * jnp.tanh(c_new)
        return h_new, c_new

    unroll = next(u for u in (8, 4, 2, 1) if CH % u == 0)
    h, c = lax.fori_loop(0, CH, step, (h_sc[...], c_sc[...]), unroll=unroll)
    h_sc[...] = h
    c_sc[...] = c

    # --- Epilogue on the last chunk: fc(h_last) -> sigmoid (no ReLU in spec). ---
    @pl.when(c_idx == pl.num_programs(1) - 1)
    def _():
        # out_features == 1: VPU multiply + lane reduction, no N=1 MXU matmul.
        logits = jnp.sum(h * wfc_ref[...], axis=-1, keepdims=True) + bfc_ref[...]
        out_ref[...] = _sigmoid_via_tanh(logits)


def _permute_gate_cols(w):
    """PyTorch gate order (i, f, g, o) along the last axis -> (i, f, o, g)."""
    i, f, g, o = jnp.split(w, 4, axis=-1)
    return jnp.concatenate([i, f, o, g], axis=-1)


def _largest_divisor(total, target, multiple=1):
    """Largest divisor of `total` that is <= target and a multiple of `multiple`;
    falls back to the full extent (always a legal BlockSpec block)."""
    if total <= target and total % multiple == 0:
        return total
    for cand in range(min(target, total), 0, -1):
        if total % cand == 0 and cand % multiple == 0:
            return cand
    return total


def _padded_bytes(shape, itemsize=4):
    """Lane/sublane-padded VMEM footprint of one buffer (rough, conservative)."""
    *lead, s, l = shape
    n = 1
    for d in lead:
        n *= d
    return n * (-(-s // 8) * 8) * (-(-l // 128) * 128) * itemsize


def lstm_classifier_forward(x, w_ih, w_hh, b_ih, b_hh, w_fc, b_fc, *,
                            time_chunk=64, batch_block=None,
                            matmul_dtype=jnp.float32):
    """x: (B, T, D) float32 (batch_first, like the PyTorch module).
    w_ih: (4H, D), w_hh: (4H, H), b_ih/b_hh: (4H,), w_fc: (1, H), b_fc: (1,)."""
    B, T, D = x.shape
    H = w_hh.shape[1]
    G = 4 * H

    # --- Parameter prep (once, plain XLA): transpose + gate-column permutation ---
    wih_t = _permute_gate_cols(jnp.transpose(w_ih).astype(jnp.float32))    # (D, 4H)
    whh_t = _permute_gate_cols(jnp.transpose(w_hh).astype(jnp.float32))    # (H, 4H)
    bias = _permute_gate_cols((b_ih + b_hh).reshape(1, G).astype(jnp.float32))
    wfc_row = w_fc.reshape(1, H).astype(jnp.float32)
    bfc = b_fc.reshape(1, 1).astype(jnp.float32)

    # --- Hoisted input projection, produced TIME-MAJOR and lane-dense: (T, B, 4H).
    # The kernel then only carries the serial recurrence.
    xw = jnp.einsum('btd,dg->tbg', x.astype(jnp.float32), wih_t) + bias    # (T, B, 4H)

    whh_mm = whh_t.astype(matmul_dtype)
    # TODO(synk): matmul_dtype=jnp.bfloat16 on v6e/v7x (halves VMEM + fast MXU path);
    # requires loosening the 1e-5 correctness tolerance to ~1e-3.

    # --- Block sizing ---
    if batch_block is None:
        half = (B // 2) // 8 * 8        # aim for >=2 batch blocks (v7x megacore)
        batch_block = half if half >= 8 else B
    bb = _largest_divisor(B, batch_block, multiple=8)   # sublane-aligned or full B
    ch = _largest_divisor(T, time_chunk, multiple=1)    # leading dim: any divisor
    grid = (B // bb, T // ch)           # (parallel batch blocks, sequential time)

    # --- Explicit scoped-VMEM limit from a generous padded-footprint estimate ---
    vmem_est = (2 * _padded_bytes((ch, bb, G))                       # xw, dbl-buffered
                + 2 * _padded_bytes((H, G), jnp.dtype(matmul_dtype).itemsize)
                + 2 * _padded_bytes((1, H)) + 2 * _padded_bytes((1, 1))
                + 2 * _padded_bytes((bb, 1))
                + 2 * _padded_bytes((bb, H)))                        # h / c scratch
    vmem_limit = int(min(max(2 * vmem_est + (2 << 20), 32 << 20), 64 << 20))

    grid_spec = pltpu.PrefetchScalarGridSpec(
        num_scalar_prefetch=0,
        grid=grid,
        in_specs=[
            pl.BlockSpec((ch, bb, G), lambda b, c: (c, b, 0)),   # time-major xw chunk
            pl.BlockSpec((H, G), lambda b, c: (0, 0)),           # resident W_hh^T
            pl.BlockSpec((1, H), lambda b, c: (0, 0)),           # fc weight row
            pl.BlockSpec((1, 1), lambda b, c: (0, 0)),           # fc bias
        ],
        out_specs=pl.BlockSpec((bb, 1), lambda b, c: (b, 0)),    # written on last chunk
        scratch_shapes=[
            pltpu.VMEM((bb, H), jnp.float32),   # h state (persists across chunks)
            pltpu.VMEM((bb, H), jnp.float32),   # c state
        ],
    )

    return pl.pallas_call(
        _lstm_recurrence_kernel,
        out_shape=jax.ShapeDtypeStruct((B, 1), jnp.float32),
        grid_spec=grid_spec,
        compiler_params=pltpu.CompilerParams(
            # Batch blocks are independent (megacore on v7x); time chunks are a
            # sequential recurrence carried through VMEM scratch.
            dimension_semantics=("parallel", "arbitrary"),
            vmem_limit_bytes=vmem_limit),
    )(xw, whh_mm, wfc_row, bfc)


def _reference_forward(x, w_ih, w_hh, b_ih, b_hh, w_fc, b_fc):
    """Pure-JAX reference matching torch.nn.LSTM -> fc(h_n[-1]) -> sigmoid."""
    B, T, D = x.shape
    H = w_hh.shape[1]
    bias = b_ih + b_hh

    def step(carry, x_t):
        h, c = carry
        gates = x_t @ w_ih.T + h @ w_hh.T + bias
        i_g = jax.nn.sigmoid(gates[:, 0 * H:1 * H])
        f_g = jax.nn.sigmoid(gates[:, 1 * H:2 * H])
        g_g = jnp.tanh(gates[:, 2 * H:3 * H])
        o_g = jax.nn.sigmoid(gates[:, 3 * H:4 * H])
        c_new = f_g * c + i_g * g_g
        h_new = o_g * jnp.tanh(c_new)
        return (h_new, c_new), None

    h0 = jnp.zeros((B, H), jnp.float32)
    c0 = jnp.zeros((B, H), jnp.float32)
    (h_last, _), _ = lax.scan(step, (h0, c0), jnp.transpose(x, (1, 0, 2)))
    return jax.nn.sigmoid(h_last @ w_fc.T + b_fc)


if __name__ == "__main__":
    B, T, D, H = 8, 8, 16, 32   # batch, seq, input_dim, hidden_dim

    key = jax.random.PRNGKey(0)
    ks = jax.random.split(key, 7)
    scale = 1.0 / jnp.sqrt(H)
    # Deterministic synthetic parameters (PyTorch-style uniform(-1/sqrt(H), 1/sqrt(H))).
    w_ih = jax.random.uniform(ks[0], (4 * H, D), jnp.float32, -scale, scale)
    w_hh = jax.random.uniform(ks[1], (4 * H, H), jnp.float32, -scale, scale)
    b_ih = jax.random.uniform(ks[2], (4 * H,), jnp.float32, -scale, scale)
    b_hh = jax.random.uniform(ks[3], (4 * H,), jnp.float32, -scale, scale)
    w_fc = jax.random.uniform(ks[4], (1, H), jnp.float32, -scale, scale)
    b_fc = jax.random.uniform(ks[5], (1,), jnp.float32, -scale, scale)
    x = jax.random.normal(ks[6], (B, T, D), jnp.float32)

    out = lstm_classifier_forward(x, w_ih, w_hh, b_ih, b_hh, w_fc, b_fc)
    out = jax.block_until_ready(out)

    ref = _reference_forward(x, w_ih, w_hh, b_ih, b_hh, w_fc, b_fc)
    assert out.shape == (B, 1)
    assert jnp.allclose(out, ref, atol=1e-5, rtol=1e-5), (out, ref)

    print("KERNEL_OK")
</pallas_src>

<mosaic_0001>
module attributes {stable_mosaic.version = 11 : i64} {
  func.func @_lstm_recurrence_kernel(%arg0: i32, %arg1: i32, %arg2: memref<8x8x128xf32, #tpu.memory_space<vmem>>, %arg3: memref<32x128xf32, #tpu.memory_space<vmem>>, %arg4: memref<1x32xf32, #tpu.memory_space<vmem>>, %arg5: memref<1x1xf32, #tpu.memory_space<vmem>>, %arg6: memref<8x1xf32, #tpu.memory_space<vmem>>, %arg7: memref<8x32xf32, #tpu.memory_space<vmem>>, %arg8: memref<8x32xf32, #tpu.memory_space<vmem>>) attributes {dimension_semantics = [#tpu.dimension_semantics<parallel>, #tpu.dimension_semantics<arbitrary>], iteration_bounds = array<i64: 1, 1>, scalar_prefetch = 0 : i64, scratch_operands = 2 : i64, tpu.core_type = #tpu.core_type<tc>, window_params = [{transform_indices = @transform_0, window_bounds = array<i64: 8, 8, 128>}, {pipeline_mode = #tpu.pipeline_mode<synchronous>, transform_indices = @transform_1, window_bounds = array<i64: 32, 128>}, {pipeline_mode = #tpu.pipeline_mode<synchronous>, transform_indices = @transform_2, window_bounds = array<i64: 1, 32>}, {pipeline_mode = #tpu.pipeline_mode<synchronous>, transform_indices = @transform_3, window_bounds = array<i64: 1, 1>}, {transform_indices = @transform_4, window_bounds = array<i64: 8, 1>}]} {
    %c0_i32 = arith.constant 0 : i32
    %0 = arith.cmpi eq, %arg1, %c0_i32 : i32
    %1 = arith.extui %0 : i1 to i32
    %c0_i32_0 = arith.constant 0 : i32
    %2 = arith.cmpi ne, %1, %c0_i32_0 : i32
    scf.if %2 {
      %cst_60 = arith.constant 0.000000e+00 : f32
      %195 = vector.broadcast %cst_60 : f32 to vector<8x32xf32>
      %c0_61 = arith.constant 0 : index
      %c0_62 = arith.constant 0 : index
      %196 = vector.load %arg7[%c0_61, %c0_62] : memref<8x32xf32, #tpu.memory_space<vmem>>, vector<8x32xf32>
      tpu.vector_store %arg7[%c0_61, %c0_62], %195 {strides = array<i32>} : memref<8x32xf32, #tpu.memory_space<vmem>>, vector<8x32xf32>,
      %cst_63 = arith.constant 0.000000e+00 : f32
      %197 = vector.broadcast %cst_63 : f32 to vector<8x32xf32>
      %c0_64 = arith.constant 0 : index
      %c0_65 = arith.constant 0 : index
      %198 = vector.load %arg8[%c0_64, %c0_65] : memref<8x32xf32, #tpu.memory_space<vmem>>, vector<8x32xf32>
      tpu.vector_store %arg8[%c0_64, %c0_65], %197 {strides = array<i32>} : memref<8x32xf32, #tpu.memory_space<vmem>>, vector<8x32xf32>,
    } else {
    }
    %c0 = arith.constant 0 : index
    %c0_1 = arith.constant 0 : index
    %3 = vector.load %arg3[%c0, %c0_1] : memref<32x128xf32, #tpu.memory_space<vmem>>, vector<32x128xf32>
    %c0_2 = arith.constant 0 : index
    %c0_3 = arith.constant 0 : index
    %4 = vector.load %arg7[%c0_2, %c0_3] : memref<8x32xf32, #tpu.memory_space<vmem>>, vector<8x32xf32>
    %c0_4 = arith.constant 0 : index
    %c0_5 = arith.constant 0 : index
    %5 = vector.load %arg8[%c0_4, %c0_5] : memref<8x32xf32, #tpu.memory_space<vmem>>, vector<8x32xf32>
    %c0_i32_6 = arith.constant 0 : i32
    %6 = arith.index_cast %c0_i32_6 : i32 to index
    %c0_7 = arith.constant 0 : index
    %c0_8 = arith.constant 0 : index
    %7 = vector.load %arg2[%6, %c0_7, %c0_8] : memref<8x8x128xf32, #tpu.memory_space<vmem>>, vector<1x8x128xf32>
    %8 = vector.shape_cast %7 : vector<1x8x128xf32> to vector<8x128xf32>
    %cst = arith.constant dense<0.000000e+00> : vector<8x128xf32>
    %9 = tpu.matmul %4, %3, %cst {dimension_numbers = #tpu.dot_dimension_numbers<[1], [0], [0], [1], [0, 0, 1, 1], [], []>} : vector<8x32xf32>, vector<32x128xf32>, vector<8x128xf32> -> vector<8x128xf32>
    %10 = arith.addf %8, %9 : vector<8x128xf32>
    %11 = vector.extract_strided_slice %10 {offsets = [0, 0], sizes = [8, 96], strides = [1, 1]} : vector<8x128xf32> to vector<8x96xf32>
    %cst_9 = arith.constant 5.000000e-01 : f32
    %12 = vector.broadcast %cst_9 : f32 to vector<8x96xf32>
    %13 = arith.mulf %12, %11 : vector<8x96xf32>
    %14 = math.tanh %13 : vector<8x96xf32>
    %cst_10 = arith.constant 1.000000e+00 : f32
    %15 = vector.broadcast %cst_10 : f32 to vector<8x96xf32>
    %16 = arith.addf %14, %15 : vector<8x96xf32>
    %cst_11 = arith.constant 5.000000e-01 : f32
    %17 = vector.broadcast %cst_11 : f32 to vector<8x96xf32>
    %18 = arith.mulf %17, %16 : vector<8x96xf32>
    %19 = vector.extract_strided_slice %18 {offsets = [0, 0], sizes = [8, 32], strides = [1, 1]} : vector<8x96xf32> to vector<8x32xf32>
    %20 = vector.extract_strided_slice %18 {offsets = [0, 32], sizes = [8, 32], strides = [1, 1]} : vector<8x96xf32> to vector<8x32xf32>
    %21 = vector.extract_strided_slice %18 {offsets = [0, 64], sizes = [8, 32], strides = [1, 1]} : vector<8x96xf32> to vector<8x32xf32>
    %22 = vector.extract_strided_slice %10 {offsets = [0, 96], sizes = [8, 32], strides = [1, 1]} : vector<8x128xf32> to vector<8x32xf32>
    %23 = math.tanh %22 : vector<8x32xf32>
    %24 = arith.mulf %20, %5 : vector<8x32xf32>
    %25 = arith.mulf %19, %23 : vector<8x32xf32>
    %26 = arith.addf %24, %25 : vector<8x32xf32>
    %27 = math.tanh %26 : vector<8x32xf32>
    %28 = arith.mulf %21, %27 : vector<8x32xf32>
    %c1_i32 = arith.constant 1 : i32
    %29 = arith.index_cast %c1_i32 : i32 to index
    %c0_12 = arith.constant 0 : index
    %c0_13 = arith.constant 0 : index
    %30 = vector.load %arg2[%29, %c0_12, %c0_13] : memref<8x8x128xf32, #tpu.memory_space<vmem>>, vector<1x8x128xf32>
    %31 = vector.shape_cast %30 : vector<1x8x128xf32> to vector<8x128xf32>
    %cst_14 = arith.constant dense<0.000000e+00> : vector<8x128xf32>
    %32 = tpu.matmul %28, %3, %cst_14 {dimension_numbers = #tpu.dot_dimension_numbers<[1], [0], [0], [1], [0, 0, 1, 1], [], []>} : vector<8x32xf32>, vector<32x128xf32>, vector<8x128xf32> -> vector<8x128xf32>
    %33 = arith.addf %31, %32 : vector<8x128xf32>
    %34 = vector.extract_strided_slice %33 {offsets = [0, 0], sizes = [8, 96], strides = [1, 1]} : vector<8x128xf32> to vector<8x96xf32>
    %cst_15 = arith.constant 5.000000e-01 : f32
    %35 = vector.broadcast %cst_15 : f32 to vector<8x96xf32>
    %36 = arith.mulf %35, %34 : vector<8x96xf32>
    %37 = math.tanh %36 : vector<8x96xf32>
    %cst_16 = arith.constant 1.000000e+00 : f32
    %38 = vector.broadcast %cst_16 : f32 to vector<8x96xf32>
    %39 = arith.addf %37, %38 : vector<8x96xf32>
    %cst_17 = arith.constant 5.000000e-01 : f32
    %40 = vector.broadcast %cst_17 : f32 to vector<8x96xf32>
    %41 = arith.mulf %40, %39 : vector<8x96xf32>
    %42 = vector.extract_strided_slice %41 {offsets = [0, 0], sizes = [8, 32], strides = [1, 1]} : vector<8x96xf32> to vector<8x32xf32>
    %43 = vector.extract_strided_slice %41 {offsets = [0, 32], sizes = [8, 32], strides = [1, 1]} : vector<8x96xf32> to vector<8x32xf32>
    %44 = vector.extract_strided_slice %41 {offsets = [0, 64], sizes = [8, 32], strides = [1, 1]} : vector<8x96xf32> to vector<8x32xf32>
    %45 = vector.extract_strided_slice %33 {offsets = [0, 96], sizes = [8, 32], strides = [1, 1]} : vector<8x128xf32> to vector<8x32xf32>
    %46 = math.tanh %45 : vector<8x32xf32>
    %47 = arith.mulf %43, %26 : vector<8x32xf32>
    %48 = arith.mulf %42, %46 : vector<8x32xf32>
    %49 = arith.addf %47, %48 : vector<8x32xf32>
    %50 = math.tanh %49 : vector<8x32xf32>
    %51 = arith.mulf %44, %50 : vector<8x32xf32>
    %c2_i32 = arith.constant 2 : i32
    %52 = arith.index_cast %c2_i32 : i32 to index
    %c0_18 = arith.constant 0 : index
    %c0_19 = arith.constant 0 : index
    %53 = vector.load %arg2[%52, %c0_18, %c0_19] : memref<8x8x128xf32, #tpu.memory_space<vmem>>, vector<1x8x128xf32>
    %54 = vector.shape_cast %53 : vector<1x8x128xf32> to vector<8x128xf32>
    %cst_20 = arith.constant dense<0.000000e+00> : vector<8x128xf32>
    %55 = tpu.matmul %51, %3, %cst_20 {dimension_numbers = #tpu.dot_dimension_numbers<[1], [0], [0], [1], [0, 0, 1, 1], [], []>} : vector<8x32xf32>, vector<32x128xf32>, vector<8x128xf32> -> vector<8x128xf32>
    %56 = arith.addf %54, %55 : vector<8x128xf32>
    %57 = vector.extract_strided_slice %56 {offsets = [0, 0], sizes = [8, 96], strides = [1, 1]} : vector<8x128xf32> to vector<8x96xf32>
    %cst_21 = arith.constant 5.000000e-01 : f32
    %58 = vector.broadcast %cst_21 : f32 to vector<8x96xf32>
    %59 = arith.mulf %58, %57 : vector<8x96xf32>
    %60 = math.tanh %59 : vector<8x96xf32>
    %cst_22 = arith.constant 1.000000e+00 : f32
    %61 = vector.broadcast %cst_22 : f32 to vector<8x96xf32>
    %62 = arith.addf %60, %61 : vector<8x96xf32>
    %cst_23 = arith.constant 5.000000e-01 : f32
    %63 = vector.broadcast %cst_23 : f32 to vector<8x96xf32>
    %64 = arith.mulf %63, %62 : vector<8x96xf32>
    %65 = vector.extract_strided_slice %64 {offsets = [0, 0], sizes = [8, 32], strides = [1, 1]} : vector<8x96xf32> to vector<8x32xf32>
    %66 = vector.extract_strided_slice %64 {offsets = [0, 32], sizes = [8, 32], strides = [1, 1]} : vector<8x96xf32> to vector<8x32xf32>
    %67 = vector.extract_strided_slice %64 {offsets = [0, 64], sizes = [8, 32], strides = [1, 1]} : vector<8x96xf32> to vector<8x32xf32>
    %68 = vector.extract_strided_slice %56 {offsets = [0, 96], sizes = [8, 32], strides = [1, 1]} : vector<8x128xf32> to vector<8x32xf32>
    %69 = math.tanh %68 : vector<8x32xf32>
    %70 = arith.mulf %66, %49 : vector<8x32xf32>
    %71 = arith.mulf %65, %69 : vector<8x32xf32>
    %72 = arith.addf %70, %71 : vector<8x32xf32>
    %73 = math.tanh %72 : vector<8x32xf32>
    %74 = arith.mulf %67, %73 : vector<8x32xf32>
    %c3_i32 = arith.constant 3 : i32
    %75 = arith.index_cast %c3_i32 : i32 to index
    %c0_24 = arith.constant 0 : index
    %c0_25 = arith.constant 0 : index
    %76 = vector.load %arg2[%75, %c0_24, %c0_25] : memref<8x8x128xf32, #tpu.memory_space<vmem>>, vector<1x8x128xf32>
    %77 = vector.shape_cast %76 : vector<1x8x128xf32> to vector<8x128xf32>
    %cst_26 = arith.constant dense<0.000000e+00> : vector<8x128xf32>
    %78 = tpu.matmul %74, %3, %cst_26 {dimension_numbers = #tpu.dot_dimension_numbers<[1], [0], [0], [1], [0, 0, 1, 1], [], []>} : vector<8x32xf32>, vector<32x128xf32>, vector<8x128xf32> -> vector<8x128xf32>
    %79 = arith.addf %77, %78 : vector<8x128xf32>
    %80 = vector.extract_strided_slice %79 {offsets = [0, 0], sizes = [8, 96], strides = [1, 1]} : vector<8x128xf32> to vector<8x96xf32>
    %cst_27 = arith.constant 5.000000e-01 : f32
    %81 = vector.broadcast %cst_27 : f32 to vector<8x96xf32>
    %82 = arith.mulf %81, %80 : vector<8x96xf32>
    %83 = math.tanh %82 : vector<8x96xf32>
    %cst_28 = arith.constant 1.000000e+00 : f32
    %84 = vector.broadcast %cst_28 : f32 to vector<8x96xf32>
    %85 = arith.addf %83, %84 : vector<8x96xf32>
    %cst_29 = arith.constant 5.000000e-01 : f32
    %86 = vector.broadcast %cst_29 : f32 to vector<8x96xf32>
    %87 = arith.mulf %86, %85 : vector<8x96xf32>
    %88 = vector.extract_strided_slice %87 {offsets = [0, 0], sizes = [8, 32], strides = [1, 1]} : vector<8x96xf32> to vector<8x32xf32>
    %89 = vector.extract_strided_slice %87 {offsets = [0, 32], sizes = [8, 32], strides = [1, 1]} : vector<8x96xf32> to vector<8x32xf32>
    %90 = vector.extract_strided_slice %87 {offsets = [0, 64], sizes = [8, 32], strides = [1, 1]} : vector<8x96xf32> to vector<8x32xf32>
    %91 = vector.extract_strided_slice %79 {offsets = [0, 96], sizes = [8, 32], strides = [1, 1]} : vector<8x128xf32> to vector<8x32xf32>
    %92 = math.tanh %91 : vector<8x32xf32>
    %93 = arith.mulf %89, %72 : vector<8x32xf32>
    %94 = arith.mulf %88, %92 : vector<8x32xf32>
    %95 = arith.addf %93, %94 : vector<8x32xf32>
    %96 = math.tanh %95 : vector<8x32xf32>
    %97 = arith.mulf %90, %96 : vector<8x32xf32>
    %c4_i32 = arith.constant 4 : i32
    %98 = arith.index_cast %c4_i32 : i32 to index
    %c0_30 = arith.constant 0 : index
    %c0_31 = arith.constant 0 : index
    %99 = vector.load %arg2[%98, %c0_30, %c0_31] : memref<8x8x128xf32, #tpu.memory_space<vmem>>, vector<1x8x128xf32>
    %100 = vector.shape_cast %99 : vector<1x8x128xf32> to vector<8x128xf32>
    %cst_32 = arith.constant dense<0.000000e+00> : vector<8x128xf32>
    %101 = tpu.matmul %97, %3, %cst_32 {dimension_numbers = #tpu.dot_dimension_numbers<[1], [0], [0], [1], [0, 0, 1, 1], [], []>} : vector<8x32xf32>, vector<32x128xf32>, vector<8x128xf32> -> vector<8x128xf32>
    %102 = arith.addf %100, %101 : vector<8x128xf32>
    %103 = vector.extract_strided_slice %102 {offsets = [0, 0], sizes = [8, 96], strides = [1, 1]} : vector<8x128xf32> to vector<8x96xf32>
    %cst_33 = arith.constant 5.000000e-01 : f32
    %104 = vector.broadcast %cst_33 : f32 to vector<8x96xf32>
    %105 = arith.mulf %104, %103 : vector<8x96xf32>
    %106 = math.tanh %105 : vector<8x96xf32>
    %cst_34 = arith.constant 1.000000e+00 : f32
    %107 = vector.broadcast %cst_34 : f32 to vector<8x96xf32>
    %108 = arith.addf %106, %107 : vector<8x96xf32>
    %cst_35 = arith.constant 5.000000e-01 : f32
    %109 = vector.broadcast %cst_35 : f32 to vector<8x96xf32>
    %110 = arith.mulf %109, %108 : vector<8x96xf32>
    %111 = vector.extract_strided_slice %110 {offsets = [0, 0], sizes = [8, 32], strides = [1, 1]} : vector<8x96xf32> to vector<8x32xf32>
    %112 = vector.extract_strided_slice %110 {offsets = [0, 32], sizes = [8, 32], strides = [1, 1]} : vector<8x96xf32> to vector<8x32xf32>
    %113 = vector.extract_strided_slice %110 {offsets = [0, 64], sizes = [8, 32], strides = [1, 1]} : vector<8x96xf32> to vector<8x32xf32>
    %114 = vector.extract_strided_slice %102 {offsets = [0, 96], sizes = [8, 32], strides = [1, 1]} : vector<8x128xf32> to vector<8x32xf32>
    %115 = math.tanh %114 : vector<8x32xf32>
    %116 = arith.mulf %112, %95 : vector<8x32xf32>
    %117 = arith.mulf %111, %115 : vector<8x32xf32>
    %118 = arith.addf %116, %117 : vector<8x32xf32>
    %119 = math.tanh %118 : vector<8x32xf32>
    %120 = arith.mulf %113, %119 : vector<8x32xf32>
    %c5_i32 = arith.constant 5 : i32
    %121 = arith.index_cast %c5_i32 : i32 to index
    %c0_36 = arith.constant 0 : index
    %c0_37 = arith.constant 0 : index
    %122 = vector.load %arg2[%121, %c0_36, %c0_37] : memref<8x8x128xf32, #tpu.memory_space<vmem>>, vector<1x8x128xf32>
    %123 = vector.shape_cast %122 : vector<1x8x128xf32> to vector<8x128xf32>
    %cst_38 = arith.constant dense<0.000000e+00> : vector<8x128xf32>
    %124 = tpu.matmul %120, %3, %cst_38 {dimension_numbers = #tpu.dot_dimension_numbers<[1], [0], [0], [1], [0, 0, 1, 1], [], []>} : vector<8x32xf32>, vector<32x128xf32>, vector<8x128xf32> -> vector<8x128xf32>
    %125 = arith.addf %123, %124 : vector<8x128xf32>
    %126 = vector.extract_strided_slice %125 {offsets = [0, 0], sizes = [8, 96], strides = [1, 1]} : vector<8x128xf32> to vector<8x96xf32>
    %cst_39 = arith.constant 5.000000e-01 : f32
    %127 = vector.broadcast %cst_39 : f32 to vector<8x96xf32>
    %128 = arith.mulf %127, %126 : vector<8x96xf32>
    %129 = math.tanh %128 : vector<8x96xf32>
    %cst_40 = arith.constant 1.000000e+00 : f32
    %130 = vector.broadcast %cst_40 : f32 to vector<8x96xf32>
    %131 = arith.addf %129, %130 : vector<8x96xf32>
    %cst_41 = arith.constant 5.000000e-01 : f32
    %132 = vector.broadcast %cst_41 : f32 to vector<8x96xf32>
    %133 = arith.mulf %132, %131 : vector<8x96xf32>
    %134 = vector.extract_strided_slice %133 {offsets = [0, 0], sizes = [8, 32], strides = [1, 1]} : vector<8x96xf32> to vector<8x32xf32>
    %135 = vector.extract_strided_slice %133 {offsets = [0, 32], sizes = [8, 32], strides = [1, 1]} : vector<8x96xf32> to vector<8x32xf32>
    %136 = vector.extract_strided_slice %133 {offsets = [0, 64], sizes = [8, 32], strides = [1, 1]} : vector<8x96xf32> to vector<8x32xf32>
    %137 = vector.extract_strided_slice %125 {offsets = [0, 96], sizes = [8, 32], strides = [1, 1]} : vector<8x128xf32> to vector<8x32xf32>
    %138 = math.tanh %137 : vector<8x32xf32>
    %139 = arith.mulf %135, %118 : vector<8x32xf32>
    %140 = arith.mulf %134, %138 : vector<8x32xf32>
    %141 = arith.addf %139, %140 : vector<8x32xf32>
    %142 = math.tanh %141 : vector<8x32xf32>
    %143 = arith.mulf %136, %142 : vector<8x32xf32>
    %c6_i32 = arith.constant 6 : i32
    %144 = arith.index_cast %c6_i32 : i32 to index
    %c0_42 = arith.constant 0 : index
    %c0_43 = arith.constant 0 : index
    %145 = vector.load %arg2[%144, %c0_42, %c0_43] : memref<8x8x128xf32, #tpu.memory_space<vmem>>, vector<1x8x128xf32>
    %146 = vector.shape_cast %145 : vector<1x8x128xf32> to vector<8x128xf32>
    %cst_44 = arith.constant dense<0.000000e+00> : vector<8x128xf32>
    %147 = tpu.matmul %143, %3, %cst_44 {dimension_numbers = #tpu.dot_dimension_numbers<[1], [0], [0], [1], [0, 0, 1, 1], [], []>} : vector<8x32xf32>, vector<32x128xf32>, vector<8x128xf32> -> vector<8x128xf32>
    %148 = arith.addf %146, %147 : vector<8x128xf32>
    %149 = vector.extract_strided_slice %148 {offsets = [0, 0], sizes = [8, 96], strides = [1, 1]} : vector<8x128xf32> to vector<8x96xf32>
    %cst_45 = arith.constant 5.000000e-01 : f32
    %150 = vector.broadcast %cst_45 : f32 to vector<8x96xf32>
    %151 = arith.mulf %150, %149 : vector<8x96xf32>
    %152 = math.tanh %151 : vector<8x96xf32>
    %cst_46 = arith.constant 1.000000e+00 : f32
    %153 = vector.broadcast %cst_46 : f32 to vector<8x96xf32>
    %154 = arith.addf %152, %153 : vector<8x96xf32>
    %cst_47 = arith.constant 5.000000e-01 : f32
    %155 = vector.broadcast %cst_47 : f32 to vector<8x96xf32>
    %156 = arith.mulf %155, %154 : vector<8x96xf32>
    %157 = vector.extract_strided_slice %156 {offsets = [0, 0], sizes = [8, 32], strides = [1, 1]} : vector<8x96xf32> to vector<8x32xf32>
    %158 = vector.extract_strided_slice %156 {offsets = [0, 32], sizes = [8, 32], strides = [1, 1]} : vector<8x96xf32> to vector<8x32xf32>
    %159 = vector.extract_strided_slice %156 {offsets = [0, 64], sizes = [8, 32], strides = [1, 1]} : vector<8x96xf32> to vector<8x32xf32>
    %160 = vector.extract_strided_slice %148 {offsets = [0, 96], sizes = [8, 32], strides = [1, 1]} : vector<8x128xf32> to vector<8x32xf32>
    %161 = math.tanh %160 : vector<8x32xf32>
    %162 = arith.mulf %158, %141 : vector<8x32xf32>
    %163 = arith.mulf %157, %161 : vector<8x32xf32>
    %164 = arith.addf %162, %163 : vector<8x32xf32>
    %165 = math.tanh %164 : vector<8x32xf32>
    %166 = arith.mulf %159, %165 : vector<8x32xf32>
    %c7_i32 = arith.constant 7 : i32
    %167 = arith.index_cast %c7_i32 : i32 to index
    %c0_48 = arith.constant 0 : index
    %c0_49 = arith.constant 0 : index
    %168 = vector.load %arg2[%167, %c0_48, %c0_49] : memref<8x8x128xf32, #tpu.memory_space<vmem>>, vector<1x8x128xf32>
    %169 = vector.shape_cast %168 : vector<1x8x128xf32> to vector<8x128xf32>
    %cst_50 = arith.constant dense<0.000000e+00> : vector<8x128xf32>
    %170 = tpu.matmul %166, %3, %cst_50 {dimension_numbers = #tpu.dot_dimension_numbers<[1], [0], [0], [1], [0, 0, 1, 1], [], []>} : vector<8x32xf32>, vector<32x128xf32>, vector<8x128xf32> -> vector<8x128xf32>
    %171 = arith.addf %169, %170 : vector<8x128xf32>
    %172 = vector.extract_strided_slice %171 {offsets = [0, 0], sizes = [8, 96], strides = [1, 1]} : vector<8x128xf32> to vector<8x96xf32>
    %cst_51 = arith.constant 5.000000e-01 : f32
    %173 = vector.broadcast %cst_51 : f32 to vector<8x96xf32>
    %174 = arith.mulf %173, %172 : vector<8x96xf32>
    %175 = math.tanh %174 : vector<8x96xf32>
    %cst_52 = arith.constant 1.000000e+00 : f32
    %176 = vector.broadcast %cst_52 : f32 to vector<8x96xf32>
    %177 = arith.addf %175, %176 : vector<8x96xf32>
    %cst_53 = arith.constant 5.000000e-01 : f32
    %178 = vector.broadcast %cst_53 : f32 to vector<8x96xf32>
    %179 = arith.mulf %178, %177 : vector<8x96xf32>
    %180 = vector.extract_strided_slice %179 {offsets = [0, 0], sizes = [8, 32], strides = [1, 1]} : vector<8x96xf32> to vector<8x32xf32>
    %181 = vector.extract_strided_slice %179 {offsets = [0, 32], sizes = [8, 32], strides = [1, 1]} : vector<8x96xf32> to vector<8x32xf32>
    %182 = vector.extract_strided_slice %179 {offsets = [0, 64], sizes = [8, 32], strides = [1, 1]} : vector<8x96xf32> to vector<8x32xf32>
    %183 = vector.extract_strided_slice %171 {offsets = [0, 96], sizes = [8, 32], strides = [1, 1]} : vector<8x128xf32> to vector<8x32xf32>
    %184 = math.tanh %183 : vector<8x32xf32>
    %185 = arith.mulf %181, %164 : vector<8x32xf32>
    %186 = arith.mulf %180, %184 : vector<8x32xf32>
    %187 = arith.addf %185, %186 : vector<8x32xf32>
    %188 = math.tanh %187 : vector<8x32xf32>
    %189 = arith.mulf %182, %188 : vector<8x32xf32>
    %c8_i32 = arith.constant 8 : i32
    %c0_54 = arith.constant 0 : index
    %c0_55 = arith.constant 0 : index
    %190 = vector.load %arg7[%c0_54, %c0_55] : memref<8x32xf32, #tpu.memory_space<vmem>>, vector<8x32xf32>
    tpu.vector_store %arg7[%c0_54, %c0_55], %189 {strides = array<i32>} : memref<8x32xf32, #tpu.memory_space<vmem>>, vector<8x32xf32>,
    %c0_56 = arith.constant 0 : index
    %c0_57 = arith.constant 0 : index
    %191 = vector.load %arg8[%c0_56, %c0_57] : memref<8x32xf32, #tpu.memory_space<vmem>>, vector<8x32xf32>
    tpu.vector_store %arg8[%c0_56, %c0_57], %187 {strides = array<i32>} : memref<8x32xf32, #tpu.memory_space<vmem>>, vector<8x32xf32>,
    %c0_i32_58 = arith.constant 0 : i32
    %192 = arith.cmpi eq, %arg1, %c0_i32_58 : i32
    %193 = arith.extui %192 : i1 to i32
    %c0_i32_59 = arith.constant 0 : i32
    %194 = arith.cmpi ne, %193, %c0_i32_59 : i32
    scf.if %194 {
      %c0_60 = arith.constant 0 : index
      %c0_61 = arith.constant 0 : index
      %195 = vector.load %arg4[%c0_60, %c0_61] : memref<1x32xf32, #tpu.memory_space<vmem>>, vector<1x32xf32>
      %196 = vector.broadcast %195 : vector<1x32xf32> to vector<8x32xf32>
      %197 = arith.mulf %189, %196 : vector<8x32xf32>
      %cst_62 = arith.constant dense<0.000000e+00> : vector<8xf32>
      %198 = vector.multi_reduction <add>, %197, %cst_62 [1] : vector<8x32xf32> to vector<8xf32>
      %199 = vector.shape_cast %198 : vector<8xf32> to vector<8x1xf32>
      %c0_63 = arith.constant 0 : index
      %c0_64 = arith.constant 0 : index
      %200 = vector.load %arg5[%c0_63, %c0_64] : memref<1x1xf32, #tpu.memory_space<vmem>>, vector<1x1xf32>
      %201 = vector.broadcast %200 : vector<1x1xf32> to vector<8x1xf32>
      %202 = arith.addf %199, %201 : vector<8x1xf32>
      %cst_65 = arith.constant 5.000000e-01 : f32
      %203 = vector.broadcast %cst_65 : f32 to vector<8x1xf32>
      %204 = arith.mulf %203, %202 : vector<8x1xf32>
      %205 = math.tanh %204 : vector<8x1xf32>
      %cst_66 = arith.constant 1.000000e+00 : f32
      %206 = vector.broadcast %cst_66 : f32 to vector<8x1xf32>
      %207 = arith.addf %205, %206 : vector<8x1xf32>
      %cst_67 = arith.constant 5.000000e-01 : f32
      %208 = vector.broadcast %cst_67 : f32 to vector<8x1xf32>
      %209 = arith.mulf %208, %207 : vector<8x1xf32>
      %c0_68 = arith.constant 0 : index
      %c0_69 = arith.constant 0 : index
      %210 = vector.load %arg6[%c0_68, %c0_69] : memref<8x1xf32, #tpu.memory_space<vmem>>, vector<8x1xf32>
      tpu.vector_store %arg6[%c0_68, %c0_69], %209 {strides = array<i32>} : memref<8x1xf32, #tpu.memory_space<vmem>>, vector<8x1xf32>,
    } else {
    }
    return
  }
  func.func @transform_0(%arg0: i32, %arg1: i32) -> (i32, i32, i32) {
    %c0_i32 = arith.constant 0 : i32
    %c0_i32_0 = arith.constant 0 : i32
    return %arg1, %arg0, %c0_i32 : i32, i32, i32
  }
  func.func @transform_1(%arg0: i32, %arg1: i32) -> (i32, i32) {
    %c0_i32 = arith.constant 0 : i32
    %c0_i32_0 = arith.constant 0 : i32
    %c0_i32_1 = arith.constant 0 : i32
    return %c0_i32, %c0_i32_0 : i32, i32
  }
  func.func @transform_2(%arg0: i32, %arg1: i32) -> (i32, i32) {
    %c0_i32 = arith.constant 0 : i32
    %c0_i32_0 = arith.constant 0 : i32
    %c0_i32_1 = arith.constant 0 : i32
    return %c0_i32, %c0_i32_0 : i32, i32
  }
  func.func @transform_3(%arg0: i32, %arg1: i32) -> (i32, i32) {
    %c0_i32 = arith.constant 0 : i32
    %c0_i32_0 = arith.constant 0 : i32
    %c0_i32_1 = arith.constant 0 : i32
    return %c0_i32, %c0_i32_0 : i32, i32
  }
  func.func @transform_4(%arg0: i32, %arg1: i32) -> (i32, i32) {
    %c0_i32 = arith.constant 0 : i32
    %c0_i32_0 = arith.constant 0 : i32
    return %arg0, %c0_i32 : i32, i32
  }
}

</mosaic_0001>

<llo_original>
// kernel: tpu_custom_call.1
$region0: #{tpu_custom_call.1}
  #allocation0 [shape = 'u32[]', space=smem, size = 0x4, offset = 0x4, fixed_abs, tag = 'smem constant byte address 0x4 - core index']
  #allocation1 [shape = 'u32[144,128]{1,0:T(1,128)}', space=vmem, size = 0x12000, scoped, tag = 'internal scratch']
  #allocation2 [shape = 'f32[8,32]{1,0:T(8,128)}', space=vmem, size = 0x1000, scoped, tag = 'scratch operand']
  #allocation3 [shape = 'f32[8,32]{1,0:T(8,128)}', space=vmem, size = 0x1000, scoped, tag = 'scratch operand']
  #allocation4 [shape = 'f32[1,1]{1,0:T(1,128)S(1)}', space=vmem, size = 0x200, scoped, tag = 'scoped memory for tpu_custom_call.1']
  %s0 = inlined_call_operand.hbm [shape: f32[8,8,128], index: 0, kind: input, shape index: {}]
  %s1 = inlined_call_operand.hbm [shape: f32[32,128], index: 1, kind: input, shape index: {}]
  %s2 = inlined_call_operand.vmem [shape: f32[1,32], index: 2, kind: input, shape index: {}]
  %s3 = inlined_call_operand.<no memory space> [shape: f32[1,1], index: 3, kind: input, shape index: {}]
  %s4 = inlined_call_operand.vmem [shape: f32[8,1], index: 4, kind: output, shape index: {}]
  %s5 = sld [smem:[#allocation0]]
  $region42: #{tpu_custom_call.1} parent=0
    _
  %s7 = ssub.s32 1, %s5
  %s8 = scalar_select 0, %s7, %s5
  %v9 = vstv %s3
  %10 = vst [vmem:[#allocation4] sm:$0x1] %v9
  $region1: #{tpu_custom_call.1} parent=0
    #allocation5 [shape = 'u8[32768]{0}', space=vmem, size = 0x8000, scoped, tag = 'input window, operand 0, single buffered']
    #allocation6 [shape = 's32[1]{0}', space=sflag, size = 0x4, scoped, tag = 'scoped memory for tpu_custom_call.1']
    #allocation7 [shape = 'u8[16384]{0}', space=vmem, size = 0x4000, scoped, tag = 'input window, operand 1, single buffered']
    #allocation8 [shape = 's32[1]{0}', space=sflag, size = 0x4, scoped, tag = 'scoped memory for tpu_custom_call.1']
    %11 = vsyncpa [#allocation6], 0
    %12 = vsyncpa [#allocation8], 0
    // Predicated region
    $region2: #{tpu_custom_call.1} parent=1 // pred_check
      _
    $region3: #{tpu_custom_call.1} parent=1 // pred_check_branch
      %14 = sbr.rel (0) target = $region5
    $region4: #{tpu_custom_call.1} parent=1 // pred_region
      %s16 = ssub.s32 1024, 1024
      %17 = vsyncadd [#allocation6], %s16
      %s18 = sshll.u32 [#allocation5], 4
      %s19 = int_to_ptr.vmem [resolvable:$true] %s18
      %24 = dma.hbm_to_vmem [thread:$0]  %s0, 1024, %s19, [#allocation6], 128, 128, 8
    $region5: #{tpu_custom_call.1} parent=1 // pred_fallthru
      _
    // Predicated region
    $region6: #{tpu_custom_call.1} parent=1 // pred_check
      _
    $region7: #{tpu_custom_call.1} parent=1 // pred_check_branch
      %26 = sbr.rel (0) target = $region9
    $region8: #{tpu_custom_call.1} parent=1 // pred_region
      %s28 = ssub.s32 512, 512
      %29 = vsyncadd [#allocation8], %s28
      %s30 = sshll.u32 [#allocation7], 4
      %s31 = int_to_ptr.vmem [resolvable:$true] %s30
      %36 = dma.hbm_to_vmem [thread:$0]  %s1, 512, %s31, [#allocation8], 128, 128, 8
    $region9: #{tpu_custom_call.1} parent=1 // pred_fallthru
      _
    // Predicated region
    $region10: #{tpu_custom_call.1} parent=1 // pred_check
      _
    $region11: #{tpu_custom_call.1} parent=1 // pred_check_branch
      %38 = sbr.rel (0) target = $region13
    $region12: #{tpu_custom_call.1} parent=1 // pred_region
      _
    $region13: #{tpu_custom_call.1} parent=1 // pred_fallthru
      _
    // Predicated region
    $region14: #{tpu_custom_call.1} parent=1 // pred_check
      _
    $region15: #{tpu_custom_call.1} parent=1 // pred_check_branch
      %40 = sbr.rel (0) target = $region17
    $region16: #{tpu_custom_call.1} parent=1 // pred_region
      _
    $region17: #{tpu_custom_call.1} parent=1 // pred_fallthru
      _
    // Predicated region
    $region18: #{tpu_custom_call.1} parent=1 // pred_check
      _
    $region19: #{tpu_custom_call.1} parent=1 // pred_check_branch
      %42 = sbr.rel (0) target = $region21
    $region20: #{tpu_custom_call.1} parent=1 // pred_region
      %43 = dma.done [#allocation6], 1024
    $region21: #{tpu_custom_call.1} parent=1 // pred_fallthru
      _
    // Predicated region
    $region22: #{tpu_custom_call.1} parent=1 // pred_check
      _
    $region23: #{tpu_custom_call.1} parent=1 // pred_check_branch
      %45 = sbr.rel (0) target = $region25
    $region24: #{tpu_custom_call.1} parent=1 // pred_region
      %46 = dma.done [#allocation8], 512
    $region25: #{tpu_custom_call.1} parent=1 // pred_fallthru
      _
    %p47 = scmp.eq.s32.totalorder 0, 0
    // Predicated region
    $region26: #{tpu_custom_call.1} parent=1 // pred_check
      %p48 = pneg %p47
    $region27: #{tpu_custom_call.1} parent=1 // pred_check_branch
      %50 = sbr.rel (%p48) target = $region29
    $region28: #{tpu_custom_call.1} parent=1 // pred_region
      %vm51 = vcmask 261120
      %52 = vst.msk [vmem:[#allocation2] sm:$0xff] %vm51, 0.0
      %53 = vst.msk [vmem:[#allocation3] sm:$0xff] %vm51, 0.0
    $region29: #{tpu_custom_call.1} parent=1 // pred_fallthru
      _
    %v54 = vld [vmem:[#allocation7] sm:$0xff]
    %v55 = vld [vmem:[#allocation7 + $0x8] sm:$0xff]
    %v56 = vld [vmem:[#allocation7 + $0x10] sm:$0xff]
    %v57 = vld [vmem:[#allocation7 + $0x18] sm:$0xff]
    %v58 = vld [vmem:[#allocation2] sm:$0xff]
    %v59 = vld [vmem:[#allocation3] sm:$0xff]
    %v60 = vld [vmem:[#allocation5] sm:$0xff]
    %vm61 = vcmask 261120
    %v63 = vsel %vm61, %v58, 0
    %65 = vmatprep.subr.mxu0 0.0
    %66 = vmatpush1.msra.mxu0 0.0
    %67 = vmatprep.subr.mxu0 0.0
    %68 = vmatpush1.msra.mxu0 0.0
    %69 = vmatprep.subr.mxu0 0.0
    %70 = vmatpush1.msra.mxu0 0.0
    %71 = vmatprep.subr.mxu0 0.0
    %72 = vmatpush1.msra.mxu0 0.0
    %73 = vmatprep.subr.mxu0 0.0
    %74 = vmatpush1.msra.mxu0 0.0
    %75 = vmatprep.subr.mxu0 0.0
    %76 = vmatpush1.msra.mxu0 0.0
    %77 = vmatprep.subr.mxu0 0.0
    %78 = vmatpush1.msra.mxu0 0.0
    %79 = vmatprep.subr.mxu0 0.0
    %80 = vmatpush1.msra.mxu0 0.0
    %81 = vmatprep.subr.mxu0 0.0
    %82 = vmatpush1.msra.mxu0 0.0
    %83 = vmatprep.subr.mxu0 0.0
    %84 = vmatpush1.msra.mxu0 0.0
    %85 = vmatprep.subr.mxu0 0.0
    %86 = vmatpush1.msra.mxu0 0.0
    %87 = vmatprep.subr.mxu0 0.0
    %88 = vmatpush1.msra.mxu0 0.0
    %89 = vmatprep.subr.mxu0 0.0
    %90 = vmatpush1.msra.mxu0 %v57
    %91 = vmatprep.subr.mxu0 0.0
    %92 = vmatpush1.msra.mxu0 %v56
    %93 = vmatprep.subr.mxu0 0.0
    %94 = vmatpush1.msra.mxu0 %v55
    %95 = vmatprep.subr.mxu0 0.0
    %96 = vmatpush1.msra.mxu0 %v54
    %97 = vmatprep.subr.mxu0 0.0
    %98 = vmatpush2.msra.mxu0 0.0
    %99 = vmatprep.subr.mxu0 0.0
    %100 = vmatpush2.msra.mxu0 0.0
    %101 = vmatprep.subr.mxu0 0.0
    %102 = vmatpush2.msra.mxu0 0.0
    %103 = vmatprep.subr.mxu0 0.0
    %104 = vmatpush2.msra.mxu0 0.0
    %105 = vmatprep.subr.mxu0 0.0
    %106 = vmatpush2.msra.mxu0 0.0
    %107 = vmatprep.subr.mxu0 0.0
    %108 = vmatpush2.msra.mxu0 0.0
    %109 = vmatprep.subr.mxu0 0.0
    %110 = vmatpush2.msra.mxu0 0.0
    %111 = vmatprep.subr.mxu0 0.0
    %112 = vmatpush2.msra.mxu0 0.0
    %113 = vmatprep.subr.mxu0 0.0
    %114 = vmatpush2.msra.mxu0 0.0
    %115 = vmatprep.subr.mxu0 0.0
    %116 = vmatpush2.msra.mxu0 0.0
    %117 = vmatprep.subr.mxu0 0.0
    %118 = vmatpush2.msra.mxu0 0.0
    %119 = vmatprep.subr.mxu0 0.0
    %120 = vmatpush2.msra.mxu0 0.0
    %121 = vmatprep.subr.mxu0 0.0
    %122 = vmatpush2.msra.mxu0 0.0
    %123 = vmatprep.subr.mxu0 0.0
    %124 = vmatpush2.msra.mxu0 0.0
    %125 = vmatprep.subr.mxu0 0.0
    %126 = vmatpush2.msra.mxu0 0.0
    %127 = vmatprep.subr.mxu0 0.0
    %128 = vmatpush2.msra.mxu0 0.0
    %129 = vmatprep.mubr.f32.mxu0 0.0
    %130 = vmatmul.mubr.f32.gmra.mxu0 %v63
    %v131 = vpop.f32.mrf.mxu0
    %v132 = vadd.f32 0.0, %v131
    %v133 = vpop.f32.mrf.mxu0
    %134 = vdwg.mxu0
    %v135 = vadd.f32 %v60, %v132
    %v136 = vmul.f32 %v135, 0.5
    %v137 = vtanh.pop %v136
    %v138 = vadd.f32 %v137, 1.0
    %v139 = vmul.f32 %v138, 0.5
    %v140 = vtanh.pop %v135
    %142 = vrot.lane.b32.xlu0 %v59, 32
    %v143 = vpop.permute.xlu0 %142
    %v145 = vmul.f32 %v139, %v143
    %147 = vrot.lane.b32.xlu0 %v140, 32
    %v148 = vpop.permute.xlu0 %147
    %v150 = vmul.f32 %v139, %v148
    %152 = vrot.lane.b32.xlu0 %v150, 32
    %v153 = vpop.permute.xlu0 %152
    %v155 = vadd.f32 %v145, %v153
    %v156 = vtanh.pop %v155
    %158 = vrot.lane.b32.xlu0 %v156, 32
    %v159 = vpop.permute.xlu0 %158
    %v161 = vmul.f32 %v139, %v159
    %s162 = scalar_lea.vmem [#allocation5], 8
    %v163 = vld [vmem:[%s162] sm:$0xff]
    %165 = vrot.lane.b32.xlu0 %v161, 64
    %v166 = vpop.permute.xlu0 %165
    %v167 = vsel %vm61, %v166, 0
    %169 = vmatprep.subr.mxu0 0.0
    %170 = vmatpush1.msra.mxu0 0.0
    %171 = vmatprep.subr.mxu0 0.0
    %172 = vmatpush1.msra.mxu0 0.0
    %173 = vmatprep.subr.mxu0 0.0
    %174 = vmatpush1.msra.mxu0 0.0
    %175 = vmatprep.subr.mxu0 0.0
    %176 = vmatpush1.msra.mxu0 0.0
    %177 = vmatprep.subr.mxu0 0.0
    %178 = vmatpush1.msra.mxu0 0.0
    %179 = vmatprep.subr.mxu0 0.0
    %180 = vmatpush1.msra.mxu0 0.0
    %181 = vmatprep.subr.mxu0 0.0
    %182 = vmatpush1.msra.mxu0 0.0
    %183 = vmatprep.subr.mxu0 0.0
    %184 = vmatpush1.msra.mxu0 0.0
    %185 = vmatprep.subr.mxu0 0.0
    %186 = vmatpush1.msra.mxu0 0.0
    %187 = vmatprep.subr.mxu0 0.0
    %188 = vmatpush1.msra.mxu0 0.0
    %189 = vmatprep.subr.mxu0 0.0
    %190 = vmatpush1.msra.mxu0 0.0
    %191 = vmatprep.subr.mxu0 0.0
    %192 = vmatpush1.msra.mxu0 0.0
    %193 = vmatprep.subr.mxu0 0.0
    %194 = vmatpush1.msra.mxu0 %v57
    %195 = vmatprep.subr.mxu0 0.0
    %196 = vmatpush1.msra.mxu0 %v56
    %197 = vmatprep.subr.mxu0 0.0
    %198 = vmatpush1.msra.mxu0 %v55
    %199 = vmatprep.subr.mxu0 0.0
    %200 = vmatpush1.msra.mxu0 %v54
    %201 = vmatprep.subr.mxu0 0.0
    %202 = vmatpush2.msra.mxu0 0.0
    %203 = vmatprep.subr.mxu0 0.0
    %204 = vmatpush2.msra.mxu0 0.0
    %205 = vmatprep.subr.mxu0 0.0
    %206 = vmatpush2.msra.mxu0 0.0
    %207 = vmatprep.subr.mxu0 0.0
    %208 = vmatpush2.msra.mxu0 0.0
    %209 = vmatprep.subr.mxu0 0.0
    %210 = vmatpush2.msra.mxu0 0.0
    %211 = vmatprep.subr.mxu0 0.0
    %212 = vmatpush2.msra.mxu0 0.0
    %213 = vmatprep.subr.mxu0 0.0
    %214 = vmatpush2.msra.mxu0 0.0
    %215 = vmatprep.subr.mxu0 0.0
    %216 = vmatpush2.msra.mxu0 0.0
    %217 = vmatprep.subr.mxu0 0.0
    %218 = vmatpush2.msra.mxu0 0.0
    %219 = vmatprep.subr.mxu0 0.0
    %220 = vmatpush2.msra.mxu0 0.0
    %221 = vmatprep.subr.mxu0 0.0
    %222 = vmatpush2.msra.mxu0 0.0
    %223 = vmatprep.subr.mxu0 0.0
    %224 = vmatpush2.msra.mxu0 0.0
    %225 = vmatprep.subr.mxu0 0.0
    %226 = vmatpush2.msra.mxu0 0.0
    %227 = vmatprep.subr.mxu0 0.0
    %228 = vmatpush2.msra.mxu0 0.0
    %229 = vmatprep.subr.mxu0 0.0
    %230 = vmatpush2.msra.mxu0 0.0
    %231 = vmatprep.subr.mxu0 0.0
    %232 = vmatpush2.msra.mxu0 0.0
    %233 = vmatprep.mubr.f32.mxu0 0.0
    %234 = vmatmul.mubr.f32.gmra.mxu0 %v167
    %v235 = vpop.f32.mrf.mxu0
    %v236 = vadd.f32 0.0, %v235
    %v237 = vpop.f32.mrf.mxu0
    %238 = vdwg.mxu0
    %v239 = vadd.f32 %v163, %v236
    %v240 = vmul.f32 %v239, 0.5
    %v241 = vtanh.pop %v240
    %v242 = vadd.f32 %v241, 1.0
    %v243 = vmul.f32 %v242, 0.5
    %v244 = vtanh.pop %v239
    %v245 = vmul.f32 %v243, %v155
    %247 = vrot.lane.b32.xlu0 %v244, 32
    %v248 = vpop.permute.xlu0 %247
    %v250 = vmul.f32 %v243, %v248
    %252 = vrot.lane.b32.xlu0 %v250, 32
    %v253 = vpop.permute.xlu0 %252
    %v255 = vadd.f32 %v245, %v253
    %v256 = vtanh.pop %v255
    %258 = vrot.lane.b32.xlu0 %v256, 32
    %v259 = vpop.permute.xlu0 %258
    %v261 = vmul.f32 %v243, %v259
    %s262 = scalar_lea.vmem [#allocation5], 16
    %v263 = vld [vmem:[%s262] sm:$0xff]
    %265 = vrot.lane.b32.xlu0 %v261, 64
    %v266 = vpop.permute.xlu0 %265
    %v267 = vsel %vm61, %v266, 0
    %269 = vmatprep.subr.mxu0 0.0
    %270 = vmatpush1.msra.mxu0 0.0
    %271 = vmatprep.subr.mxu0 0.0
    %272 = vmatpush1.msra.mxu0 0.0
    %273 = vmatprep.subr.mxu0 0.0
    %274 = vmatpush1.msra.mxu0 0.0
    %275 = vmatprep.subr.mxu0 0.0
    %276 = vmatpush1.msra.mxu0 0.0
    %277 = vmatprep.subr.mxu0 0.0
    %278 = vmatpush1.msra.mxu0 0.0
    %279 = vmatprep.subr.mxu0 0.0
    %280 = vmatpush1.msra.mxu0 0.0
    %281 = vmatprep.subr.mxu0 0.0
    %282 = vmatpush1.msra.mxu0 0.0
    %283 = vmatprep.subr.mxu0 0.0
    %284 = vmatpush1.msra.mxu0 0.0
    %285 = vmatprep.subr.mxu0 0.0
    %286 = vmatpush1.msra.mxu0 0.0
    %287 = vmatprep.subr.mxu0 0.0
    %288 = vmatpush1.msra.mxu0 0.0
    %289 = vmatprep.subr.mxu0 0.0
    %290 = vmatpush1.msra.mxu0 0.0
    %291 = vmatprep.subr.mxu0 0.0
    %292 = vmatpush1.msra.mxu0 0.0
    %293 = vmatprep.subr.mxu0 0.0
    %294 = vmatpush1.msra.mxu0 %v57
    %295 = vmatprep.subr.mxu0 0.0
    %296 = vmatpush1.msra.mxu0 %v56
    %297 = vmatprep.subr.mxu0 0.0
    %298 = vmatpush1.msra.mxu0 %v55
    %299 = vmatprep.subr.mxu0 0.0
    %300 = vmatpush1.msra.mxu0 %v54
    %301 = vmatprep.subr.mxu0 0.0
    %302 = vmatpush2.msra.mxu0 0.0
    %303 = vmatprep.subr.mxu0 0.0
    %304 = vmatpush2.msra.mxu0 0.0
    %305 = vmatprep.subr.mxu0 0.0
    %306 = vmatpush2.msra.mxu0 0.0
    %307 = vmatprep.subr.mxu0 0.0
    %308 = vmatpush2.msra.mxu0 0.0
    %309 = vmatprep.subr.mxu0 0.0
    %310 = vmatpush2.msra.mxu0 0.0
    %311 = vmatprep.subr.mxu0 0.0
    %312 = vmatpush2.msra.mxu0 0.0
    %313 = vmatprep.subr.mxu0 0.0
    %314 = vmatpush2.msra.mxu0 0.0
    %315 = vmatprep.subr.mxu0 0.0
    %316 = vmatpush2.msra.mxu0 0.0
    %317 = vmatprep.subr.mxu0 0.0
    %318 = vmatpush2.msra.mxu0 0.0
    %319 = vmatprep.subr.mxu0 0.0
    %320 = vmatpush2.msra.mxu0 0.0
    %321 = vmatprep.subr.mxu0 0.0
    %322 = vmatpush2.msra.mxu0 0.0
    %323 = vmatprep.subr.mxu0 0.0
    %324 = vmatpush2.msra.mxu0 0.0
    %325 = vmatprep.subr.mxu0 0.0
    %326 = vmatpush2.msra.mxu0 0.0
    %327 = vmatprep.subr.mxu0 0.0
    %328 = vmatpush2.msra.mxu0 0.0
    %329 = vmatprep.subr.mxu0 0.0
    %330 = vmatpush2.msra.mxu0 0.0
    %331 = vmatprep.subr.mxu0 0.0
    %332 = vmatpush2.msra.mxu0 0.0
    %333 = vmatprep.mubr.f32.mxu0 0.0
    %334 = vmatmul.mubr.f32.gmra.mxu0 %v267
    %v335 = vpop.f32.mrf.mxu0
    %v336 = vadd.f32 0.0, %v335
    %v337 = vpop.f32.mrf.mxu0
    %338 = vdwg.mxu0
    %v339 = vadd.f32 %v263, %v336
    %v340 = vmul.f32 %v339, 0.5
    %v341 = vtanh.pop %v340
    %v342 = vadd.f32 %v341, 1.0
    %v343 = vmul.f32 %v342, 0.5
    %v344 = vtanh.pop %v339
    %v345 = vmul.f32 %v343, %v255
    %347 = vrot.lane.b32.xlu0 %v344, 32
    %v348 = vpop.permute.xlu0 %347
    %v350 = vmul.f32 %v343, %v348
    %352 = vrot.lane.b32.xlu0 %v350, 32
    %v353 = vpop.permute.xlu0 %352
    %v355 = vadd.f32 %v345, %v353
    %v356 = vtanh.pop %v355
    %358 = vrot.lane.b32.xlu0 %v356, 32
    %v359 = vpop.permute.xlu0 %358
    %v361 = vmul.f32 %v343, %v359
    %s362 = scalar_lea.vmem [#allocation5], 24
    %v363 = vld [vmem:[%s362] sm:$0xff]
    %365 = vrot.lane.b32.xlu0 %v361, 64
    %v366 = vpop.permute.xlu0 %365
    %v367 = vsel %vm61, %v366, 0
    %369 = vmatprep.subr.mxu0 0.0
    %370 = vmatpush1.msra.mxu0 0.0
    %371 = vmatprep.subr.mxu0 0.0
    %372 = vmatpush1.msra.mxu0 0.0
    %373 = vmatprep.subr.mxu0 0.0
    %374 = vmatpush1.msra.mxu0 0.0
    %375 = vmatprep.subr.mxu0 0.0
    %376 = vmatpush1.msra.mxu0 0.0
    %377 = vmatprep.subr.mxu0 0.0
    %378 = vmatpush1.msra.mxu0 0.0
    %379 = vmatprep.subr.mxu0 0.0
    %380 = vmatpush1.msra.mxu0 0.0
    %381 = vmatprep.subr.mxu0 0.0
    %382 = vmatpush1.msra.mxu0 0.0
    %383 = vmatprep.subr.mxu0 0.0
    %384 = vmatpush1.msra.mxu0 0.0
    %385 = vmatprep.subr.mxu0 0.0
    %386 = vmatpush1.msra.mxu0 0.0
    %387 = vmatprep.subr.mxu0 0.0
    %388 = vmatpush1.msra.mxu0 0.0
    %389 = vmatprep.subr.mxu0 0.0
    %390 = vmatpush1.msra.mxu0 0.0
    %391 = vmatprep.subr.mxu0 0.0
    %392 = vmatpush1.msra.mxu0 0.0
    %393 = vmatprep.subr.mxu0 0.0
    %394 = vmatpush1.msra.mxu0 %v57
    %395 = vmatprep.subr.mxu0 0.0
    %396 = vmatpush1.msra.mxu0 %v56
    %397 = vmatprep.subr.mxu0 0.0
    %398 = vmatpush1.msra.mxu0 %v55
    %399 = vmatprep.subr.mxu0 0.0
    %400 = vmatpush1.msra.mxu0 %v54
    %401 = vmatprep.subr.mxu0 0.0
    %402 = vmatpush2.msra.mxu0 0.0
    %403 = vmatprep.subr.mxu0 0.0
    %404 = vmatpush2.msra.mxu0 0.0
    %405 = vmatprep.subr.mxu0 0.0
    %406 = vmatpush2.msra.mxu0 0.0
    %407 = vmatprep.subr.mxu0 0.0
    %408 = vmatpush2.msra.mxu0 0.0
    %409 = vmatprep.subr.mxu0 0.0
    %410 = vmatpush2.msra.mxu0 0.0
    %411 = vmatprep.subr.mxu0 0.0
    %412 = vmatpush2.msra.mxu0 0.0
    %413 = vmatprep.subr.mxu0 0.0
    %414 = vmatpush2.msra.mxu0 0.0
    %415 = vmatprep.subr.mxu0 0.0
    %416 = vmatpush2.msra.mxu0 0.0
    %417 = vmatprep.subr.mxu0 0.0
    %418 = vmatpush2.msra.mxu0 0.0
    %419 = vmatprep.subr.mxu0 0.0
    %420 = vmatpush2.msra.mxu0 0.0
    %421 = vmatprep.subr.mxu0 0.0
    %422 = vmatpush2.msra.mxu0 0.0
    %423 = vmatprep.subr.mxu0 0.0
    %424 = vmatpush2.msra.mxu0 0.0
    %425 = vmatprep.subr.mxu0 0.0
    %426 = vmatpush2.msra.mxu0 0.0
    %427 = vmatprep.subr.mxu0 0.0
    %428 = vmatpush2.msra.mxu0 0.0
    %429 = vmatprep.subr.mxu0 0.0
    %430 = vmatpush2.msra.mxu0 0.0
    %431 = vmatprep.subr.mxu0 0.0
    %432 = vmatpush2.msra.mxu0 0.0
    %433 = vmatprep.mubr.f32.mxu0 0.0
    %434 = vmatmul.mubr.f32.gmra.mxu0 %v367
    %v435 = vpop.f32.mrf.mxu0
    %v436 = vadd.f32 0.0, %v435
    %v437 = vpop.f32.mrf.mxu0
    %438 = vdwg.mxu0
    %v439 = vadd.f32 %v363, %v436
    %v440 = vmul.f32 %v439, 0.5
    %v441 = vtanh.pop %v440
    %v442 = vadd.f32 %v441, 1.0
    %v443 = vmul.f32 %v442, 0.5
    %v444 = vtanh.pop %v439
    %v445 = vmul.f32 %v443, %v355
    %447 = vrot.lane.b32.xlu0 %v444, 32
    %v448 = vpop.permute.xlu0 %447
    %v450 = vmul.f32 %v443, %v448
    %452 = vrot.lane.b32.xlu0 %v450, 32
    %v453 = vpop.permute.xlu0 %452
    %v455 = vadd.f32 %v445, %v453
    %v456 = vtanh.pop %v455
    %458 = vrot.lane.b32.xlu0 %v456, 32
    %v459 = vpop.permute.xlu0 %458
    %v461 = vmul.f32 %v443, %v459
    %s462 = scalar_lea.vmem [#allocation5], 32
    %v463 = vld [vmem:[%s462] sm:$0xff]
    %465 = vrot.lane.b32.xlu0 %v461, 64
    %v466 = vpop.permute.xlu0 %465
    %v467 = vsel %vm61, %v466, 0
    %469 = vmatprep.subr.mxu0 0.0
    %470 = vmatpush1.msra.mxu0 0.0
    %471 = vmatprep.subr.mxu0 0.0
    %472 = vmatpush1.msra.mxu0 0.0
    %473 = vmatprep.subr.mxu0 0.0
    %474 = vmatpush1.msra.mxu0 0.0
    %475 = vmatprep.subr.mxu0 0.0
    %476 = vmatpush1.msra.mxu0 0.0
    %477 = vmatprep.subr.mxu0 0.0
    %478 = vmatpush1.msra.mxu0 0.0
    %479 = vmatprep.subr.mxu0 0.0
    %480 = vmatpush1.msra.mxu0 0.0
    %481 = vmatprep.subr.mxu0 0.0
    %482 = vmatpush1.msra.mxu0 0.0
    %483 = vmatprep.subr.mxu0 0.0
    %484 = vmatpush1.msra.mxu0 0.0
    %485 = vmatprep.subr.mxu0 0.0
    %486 = vmatpush1.msra.mxu0 0.0
    %487 = vmatprep.subr.mxu0 0.0
    %488 = vmatpush1.msra.mxu0 0.0
    %489 = vmatprep.subr.mxu0 0.0
    %490 = vmatpush1.msra.mxu0 0.0
    %491 = vmatprep.subr.mxu0 0.0
    %492 = vmatpush1.msra.mxu0 0.0
    %493 = vmatprep.subr.mxu0 0.0
    %494 = vmatpush1.msra.mxu0 %v57
    %495 = vmatprep.subr.mxu0 0.0
    %496 = vmatpush1.msra.mxu0 %v56
    %497 = vmatprep.subr.mxu0 0.0
    %498 = vmatpush1.msra.mxu0 %v55
    %499 = vmatprep.subr.mxu0 0.0
    %500 = vmatpush1.msra.mxu0 %v54
    %501 = vmatprep.subr.mxu0 0.0
    %502 = vmatpush2.msra.mxu0 0.0
    %503 = vmatprep.subr.mxu0 0.0
    %504 = vmatpush2.msra.mxu0 0.0
    %505 = vmatprep.subr.mxu0 0.0
    %506 = vmatpush2.msra.mxu0 0.0
    %507 = vmatprep.subr.mxu0 0.0
    %508 = vmatpush2.msra.mxu0 0.0
    %509 = vmatprep.subr.mxu0 0.0
    %510 = vmatpush2.msra.mxu0 0.0
    %511 = vmatprep.subr.mxu0 0.0
    %512 = vmatpush2.msra.mxu0 0.0
    %513 = vmatprep.subr.mxu0 0.0
    %514 = vmatpush2.msra.mxu0 0.0
    %515 = vmatprep.subr.mxu0 0.0
    %516 = vmatpush2.msra.mxu0 0.0
    %517 = vmatprep.subr.mxu0 0.0
    %518 = vmatpush2.msra.mxu0 0.0
    %519 = vmatprep.subr.mxu0 0.0
    %520 = vmatpush2.msra.mxu0 0.0
    %521 = vmatprep.subr.mxu0 0.0
    %522 = vmatpush2.msra.mxu0 0.0
    %523 = vmatprep.subr.mxu0 0.0
    %524 = vmatpush2.msra.mxu0 0.0
    %525 = vmatprep.subr.mxu0 0.0
    %526 = vmatpush2.msra.mxu0 0.0
    %527 = vmatprep.subr.mxu0 0.0
    %528 = vmatpush2.msra.mxu0 0.0
    %529 = vmatprep.subr.mxu0 0.0
    %530 = vmatpush2.msra.mxu0 0.0
    %531 = vmatprep.subr.mxu0 0.0
    %532 = vmatpush2.msra.mxu0 0.0
    %533 = vmatprep.mubr.f32.mxu0 0.0
    %534 = vmatmul.mubr.f32.gmra.mxu0 %v467
    %v535 = vpop.f32.mrf.mxu0
    %v536 = vadd.f32 0.0, %v535
    %v537 = vpop.f32.mrf.mxu0
    %538 = vdwg.mxu0
    %v539 = vadd.f32 %v463, %v536
    %v540 = vmul.f32 %v539, 0.5
    %v541 = vtanh.pop %v540
    %v542 = vadd.f32 %v541, 1.0
    %v543 = vmul.f32 %v542, 0.5
    %v544 = vtanh.pop %v539
    %v545 = vmul.f32 %v543, %v455
    %547 = vrot.lane.b32.xlu0 %v544, 32
    %v548 = vpop.permute.xlu0 %547
    %v550 = vmul.f32 %v543, %v548
    %552 = vrot.lane.b32.xlu0 %v550, 32
    %v553 = vpop.permute.xlu0 %552
    %v555 = vadd.f32 %v545, %v553
    %v556 = vtanh.pop %v555
    %558 = vrot.lane.b32.xlu0 %v556, 32
    %v559 = vpop.permute.xlu0 %558
    %v561 = vmul.f32 %v543, %v559
    %s562 = scalar_lea.vmem [#allocation5], 40
    %v563 = vld [vmem:[%s562] sm:$0xff]
    %565 = vrot.lane.b32.xlu0 %v561, 64
    %v566 = vpop.permute.xlu0 %565
    %v567 = vsel %vm61, %v566, 0
    %569 = vmatprep.subr.mxu0 0.0
    %570 = vmatpush1.msra.mxu0 0.0
    %571 = vmatprep.subr.mxu0 0.0
    %572 = vmatpush1.msra.mxu0 0.0
    %573 = vmatprep.subr.mxu0 0.0
    %574 = vmatpush1.msra.mxu0 0.0
    %575 = vmatprep.subr.mxu0 0.0
    %576 = vmatpush1.msra.mxu0 0.0
    %577 = vmatprep.subr.mxu0 0.0
    %578 = vmatpush1.msra.mxu0 0.0
    %579 = vmatprep.subr.mxu0 0.0
    %580 = vmatpush1.msra.mxu0 0.0
    %581 = vmatprep.subr.mxu0 0.0
    %582 = vmatpush1.msra.mxu0 0.0
    %583 = vmatprep.subr.mxu0 0.0
    %584 = vmatpush1.msra.mxu0 0.0
    %585 = vmatprep.subr.mxu0 0.0
    %586 = vmatpush1.msra.mxu0 0.0
    %587 = vmatprep.subr.mxu0 0.0
    %588 = vmatpush1.msra.mxu0 0.0
    %589 = vmatprep.subr.mxu0 0.0
    %590 = vmatpush1.msra.mxu0 0.0
    %591 = vmatprep.subr.mxu0 0.0
    %592 = vmatpush1.msra.mxu0 0.0
    %593 = vmatprep.subr.mxu0 0.0
    %594 = vmatpush1.msra.mxu0 %v57
    %595 = vmatprep.subr.mxu0 0.0
    %596 = vmatpush1.msra.mxu0 %v56
    %597 = vmatprep.subr.mxu0 0.0
    %598 = vmatpush1.msra.mxu0 %v55
    %599 = vmatprep.subr.mxu0 0.0
    %600 = vmatpush1.msra.mxu0 %v54
    %601 = vmatprep.subr.mxu0 0.0
    %602 = vmatpush2.msra.mxu0 0.0
    %603 = vmatprep.subr.mxu0 0.0
    %604 = vmatpush2.msra.mxu0 0.0
    %605 = vmatprep.subr.mxu0 0.0
    %606 = vmatpush2.msra.mxu0 0.0
    %607 = vmatprep.subr.mxu0 0.0
    %608 = vmatpush2.msra.mxu0 0.0
    %609 = vmatprep.subr.mxu0 0.0
    %610 = vmatpush2.msra.mxu0 0.0
    %611 = vmatprep.subr.mxu0 0.0
    %612 = vmatpush2.msra.mxu0 0.0
    %613 = vmatprep.subr.mxu0 0.0
    %614 = vmatpush2.msra.mxu0 0.0
    %615 = vmatprep.subr.mxu0 0.0
    %616 = vmatpush2.msra.mxu0 0.0
    %617 = vmatprep.subr.mxu0 0.0
    %618 = vmatpush2.msra.mxu0 0.0
    %619 = vmatprep.subr.mxu0 0.0
    %620 = vmatpush2.msra.mxu0 0.0
    %621 = vmatprep.subr.mxu0 0.0
    %622 = vmatpush2.msra.mxu0 0.0
    %623 = vmatprep.subr.mxu0 0.0
    %624 = vmatpush2.msra.mxu0 0.0
    %625 = vmatprep.subr.mxu0 0.0
    %626 = vmatpush2.msra.mxu0 0.0
    %627 = vmatprep.subr.mxu0 0.0
    %628 = vmatpush2.msra.mxu0 0.0
    %629 = vmatprep.subr.mxu0 0.0
    %630 = vmatpush2.msra.mxu0 0.0
    %631 = vmatprep.subr.mxu0 0.0
    %632 = vmatpush2.msra.mxu0 0.0
    %633 = vmatprep.mubr.f32.mxu0 0.0
    %634 = vmatmul.mubr.f32.gmra.mxu0 %v567
    %v635 = vpop.f32.mrf.mxu0
    %v636 = vadd.f32 0.0, %v635
    %v637 = vpop.f32.mrf.mxu0
    %638 = vdwg.mxu0
    %v639 = vadd.f32 %v563, %v636
    %v640 = vmul.f32 %v639, 0.5
    %v641 = vtanh.pop %v640
    %v642 = vadd.f32 %v641, 1.0
    %v643 = vmul.f32 %v642, 0.5
    %v644 = vtanh.pop %v639
    %v645 = vmul.f32 %v643, %v555
    %647 = vrot.lane.b32.xlu0 %v644, 32
    %v648 = vpop.permute.xlu0 %647
    %v650 = vmul.f32 %v643, %v648
    %652 = vrot.lane.b32.xlu0 %v650, 32
    %v653 = vpop.permute.xlu0 %652
    %v655 = vadd.f32 %v645, %v653
    %v656 = vtanh.pop %v655
    %658 = vrot.lane.b32.xlu0 %v656, 32
    %v659 = vpop.permute.xlu0 %658
    %v661 = vmul.f32 %v643, %v659
    %s662 = scalar_lea.vmem [#allocation5], 48
    %v663 = vld [vmem:[%s662] sm:$0xff]
    %665 = vrot.lane.b32.xlu0 %v661, 64
    %v666 = vpop.permute.xlu0 %665
    %v667 = vsel %vm61, %v666, 0
    %669 = vmatprep.subr.mxu0 0.0
    %670 = vmatpush1.msra.mxu0 0.0
    %671 = vmatprep.subr.mxu0 0.0
    %672 = vmatpush1.msra.mxu0 0.0
    %673 = vmatprep.subr.mxu0 0.0
    %674 = vmatpush1.msra.mxu0 0.0
    %675 = vmatprep.subr.mxu0 0.0
    %676 = vmatpush1.msra.mxu0 0.0
    %677 = vmatprep.subr.mxu0 0.0
    %678 = vmatpush1.msra.mxu0 0.0
    %679 = vmatprep.subr.mxu0 0.0
    %680 = vmatpush1.msra.mxu0 0.0
    %681 = vmatprep.subr.mxu0 0.0
    %682 = vmatpush1.msra.mxu0 0.0
    %683 = vmatprep.subr.mxu0 0.0
    %684 = vmatpush1.msra.mxu0 0.0
    %685 = vmatprep.subr.mxu0 0.0
    %686 = vmatpush1.msra.mxu0 0.0
    %687 = vmatprep.subr.mxu0 0.0
    %688 = vmatpush1.msra.mxu0 0.0
    %689 = vmatprep.subr.mxu0 0.0
    %690 = vmatpush1.msra.mxu0 0.0
    %691 = vmatprep.subr.mxu0 0.0
    %692 = vmatpush1.msra.mxu0 0.0
    %693 = vmatprep.subr.mxu0 0.0
    %694 = vmatpush1.msra.mxu0 %v57
    %695 = vmatprep.subr.mxu0 0.0
    %696 = vmatpush1.msra.mxu0 %v56
    %697 = vmatprep.subr.mxu0 0.0
    %698 = vmatpush1.msra.mxu0 %v55
    %699 = vmatprep.subr.mxu0 0.0
    %700 = vmatpush1.msra.mxu0 %v54
    %701 = vmatprep.subr.mxu0 0.0
    %702 = vmatpush2.msra.mxu0 0.0
    %703 = vmatprep.subr.mxu0 0.0
    %704 = vmatpush2.msra.mxu0 0.0
    %705 = vmatprep.subr.mxu0 0.0
    %706 = vmatpush2.msra.mxu0 0.0
    %707 = vmatprep.subr.mxu0 0.0
    %708 = vmatpush2.msra.mxu0 0.0
    %709 = vmatprep.subr.mxu0 0.0
    %710 = vmatpush2.msra.mxu0 0.0
    %711 = vmatprep.subr.mxu0 0.0
    %712 = vmatpush2.msra.mxu0 0.0
    %713 = vmatprep.subr.mxu0 0.0
    %714 = vmatpush2.msra.mxu0 0.0
    %715 = vmatprep.subr.mxu0 0.0
    %716 = vmatpush2.msra.mxu0 0.0
    %717 = vmatprep.subr.mxu0 0.0
    %718 = vmatpush2.msra.mxu0 0.0
    %719 = vmatprep.subr.mxu0 0.0
    %720 = vmatpush2.msra.mxu0 0.0
    %721 = vmatprep.subr.mxu0 0.0
    %722 = vmatpush2.msra.mxu0 0.0
    %723 = vmatprep.subr.mxu0 0.0
    %724 = vmatpush2.msra.mxu0 0.0
    %725 = vmatprep.subr.mxu0 0.0
    %726 = vmatpush2.msra.mxu0 0.0
    %727 = vmatprep.subr.mxu0 0.0
    %728 = vmatpush2.msra.mxu0 0.0
    %729 = vmatprep.subr.mxu0 0.0
    %730 = vmatpush2.msra.mxu0 0.0
    %731 = vmatprep.subr.mxu0 0.0
    %732 = vmatpush2.msra.mxu0 0.0
    %733 = vmatprep.mubr.f32.mxu0 0.0
    %734 = vmatmul.mubr.f32.gmra.mxu0 %v667
    %v735 = vpop.f32.mrf.mxu0
    %v736 = vadd.f32 0.0, %v735
    %v737 = vpop.f32.mrf.mxu0
    %738 = vdwg.mxu0
    %v739 = vadd.f32 %v663, %v736
    %v740 = vmul.f32 %v739, 0.5
    %v741 = vtanh.pop %v740
    %v742 = vadd.f32 %v741, 1.0
    %v743 = vmul.f32 %v742, 0.5
    %v744 = vtanh.pop %v739
    %v745 = vmul.f32 %v743, %v655
    %747 = vrot.lane.b32.xlu0 %v744, 32
    %v748 = vpop.permute.xlu0 %747
    %v750 = vmul.f32 %v743, %v748
    %752 = vrot.lane.b32.xlu0 %v750, 32
    %v753 = vpop.permute.xlu0 %752
    %v755 = vadd.f32 %v745, %v753
    %v756 = vtanh.pop %v755
    %758 = vrot.lane.b32.xlu0 %v756, 32
    %v759 = vpop.permute.xlu0 %758
    %v761 = vmul.f32 %v743, %v759
    %s762 = scalar_lea.vmem [#allocation5], 56
    %v763 = vld [vmem:[%s762] sm:$0xff]
    %765 = vrot.lane.b32.xlu0 %v761, 64
    %v766 = vpop.permute.xlu0 %765
    %v767 = vsel %vm61, %v766, 0
    %769 = vmatprep.subr.mxu0 0.0
    %770 = vmatpush1.msra.mxu0 0.0
    %771 = vmatprep.subr.mxu0 0.0
    %772 = vmatpush1.msra.mxu0 0.0
    %773 = vmatprep.subr.mxu0 0.0
    %774 = vmatpush1.msra.mxu0 0.0
    %775 = vmatprep.subr.mxu0 0.0
    %776 = vmatpush1.msra.mxu0 0.0
    %777 = vmatprep.subr.mxu0 0.0
    %778 = vmatpush1.msra.mxu0 0.0
    %779 = vmatprep.subr.mxu0 0.0
    %780 = vmatpush1.msra.mxu0 0.0
    %781 = vmatprep.subr.mxu0 0.0
    %782 = vmatpush1.msra.mxu0 0.0
    %783 = vmatprep.subr.mxu0 0.0
    %784 = vmatpush1.msra.mxu0 0.0
    %785 = vmatprep.subr.mxu0 0.0
    %786 = vmatpush1.msra.mxu0 0.0
    %787 = vmatprep.subr.mxu0 0.0
    %788 = vmatpush1.msra.mxu0 0.0
    %789 = vmatprep.subr.mxu0 0.0
    %790 = vmatpush1.msra.mxu0 0.0
    %791 = vmatprep.subr.mxu0 0.0
    %792 = vmatpush1.msra.mxu0 0.0
    %793 = vmatprep.subr.mxu0 0.0
    %794 = vmatpush1.msra.mxu0 %v57
    %795 = vmatprep.subr.mxu0 0.0
    %796 = vmatpush1.msra.mxu0 %v56
    %797 = vmatprep.subr.mxu0 0.0
    %798 = vmatpush1.msra.mxu0 %v55
    %799 = vmatprep.subr.mxu0 0.0
    %800 = vmatpush1.msra.mxu0 %v54
    %801 = vmatprep.subr.mxu0 0.0
    %802 = vmatpush2.msra.mxu0 0.0
    %803 = vmatprep.subr.mxu0 0.0
    %804 = vmatpush2.msra.mxu0 0.0
    %805 = vmatprep.subr.mxu0 0.0
    %806 = vmatpush2.msra.mxu0 0.0
    %807 = vmatprep.subr.mxu0 0.0
    %808 = vmatpush2.msra.mxu0 0.0
    %809 = vmatprep.subr.mxu0 0.0
    %810 = vmatpush2.msra.mxu0 0.0
    %811 = vmatprep.subr.mxu0 0.0
    %812 = vmatpush2.msra.mxu0 0.0
    %813 = vmatprep.subr.mxu0 0.0
    %814 = vmatpush2.msra.mxu0 0.0
    %815 = vmatprep.subr.mxu0 0.0
    %816 = vmatpush2.msra.mxu0 0.0
    %817 = vmatprep.subr.mxu0 0.0
    %818 = vmatpush2.msra.mxu0 0.0
    %819 = vmatprep.subr.mxu0 0.0
    %820 = vmatpush2.msra.mxu0 0.0
    %821 = vmatprep.subr.mxu0 0.0
    %822 = vmatpush2.msra.mxu0 0.0
    %823 = vmatprep.subr.mxu0 0.0
    %824 = vmatpush2.msra.mxu0 0.0
    %825 = vmatprep.subr.mxu0 0.0
    %826 = vmatpush2.msra.mxu0 0.0
    %827 = vmatprep.subr.mxu0 0.0
    %828 = vmatpush2.msra.mxu0 0.0
    %829 = vmatprep.subr.mxu0 0.0
    %830 = vmatpush2.msra.mxu0 0.0
    %831 = vmatprep.subr.mxu0 0.0
    %832 = vmatpush2.msra.mxu0 0.0
    %833 = vmatprep.mubr.f32.mxu0 0.0
    %834 = vmatmul.mubr.f32.gmra.mxu0 %v767
    %v835 = vpop.f32.mrf.mxu0
    %v836 = vadd.f32 0.0, %v835
    %v837 = vpop.f32.mrf.mxu0
    %838 = vdwg.mxu0
    %v839 = vadd.f32 %v763, %v836
    %v840 = vmul.f32 %v839, 0.5
    %v841 = vtanh.pop %v840
    %v842 = vadd.f32 %v841, 1.0
    %v843 = vmul.f32 %v842, 0.5
    %v844 = vtanh.pop %v839
    %v845 = vmul.f32 %v843, %v755
    %847 = vrot.lane.b32.xlu0 %v844, 32
    %v848 = vpop.permute.xlu0 %847
    %v850 = vmul.f32 %v843, %v848
    %852 = vrot.lane.b32.xlu0 %v850, 32
    %v853 = vpop.permute.xlu0 %852
    %v855 = vadd.f32 %v845, %v853
    %v856 = vtanh.pop %v855
    %858 = vrot.lane.b32.xlu0 %v856, 32
    %v859 = vpop.permute.xlu0 %858
    %v861 = vmul.f32 %v843, %v859
    %863 = vrot.lane.b32.xlu0 %v861, 64
    %v864 = vpop.permute.xlu0 %863
    %866 = vst.msk [vmem:[#allocation2] sm:$0xff] %vm61, %v864
    %868 = vrot.lane.b32.xlu0 %v855, 96
    %v869 = vpop.permute.xlu0 %868
    %871 = vst.msk [vmem:[#allocation3] sm:$0xff] %vm61, %v869
    // Predicated region
    $region30: #{tpu_custom_call.1} parent=1 // pred_check
      %p872 = pneg %p47
    $region31: #{tpu_custom_call.1} parent=1 // pred_check_branch
      %874 = sbr.rel (%p872) target = $region33
    $region32: #{tpu_custom_call.1} parent=1 // pred_region
      %v875 = vld [vmem:[%s2] sm:$0x1]
      %v877 = vlaneseq
      %v878 = vshrl.u32 %v877, 7
      %v879 = vsub.s32 0, %v878
      %v880 = vrot.slane %v875, %v879
      %881 = vrot.lane.b32.xlu0 %v880, 64
      %v882 = vpop.permute.xlu0 %881
      %v884 = vmul.f32 %v861, %v882
      %886 = vrot.lane.b32.xlu0 %v884, 64
      %v887 = vpop.permute.xlu0 %886
      %v889 = vsel %vm61, %v887, 0.0
      %890 = vadd.xlane.f32.xlu0 %v889
      %v891 = vpop.xlane.xlu0 %890
      %v892 = vld [vmem:[#allocation4] sm:$0x1]
      %v894 = vlaneseq
      %v895 = vshrl.u32 %v894, 7
      %v896 = vsub.s32 0, %v895
      %v897 = vrot.slane %v892, %v896
      %v899 = vadd.f32 %v891, %v897
      %v900 = vmul.f32 %v899, 0.5
      %v901 = vtanh.pop %v900
      %v902 = vadd.f32 %v901, 1.0
      %v903 = vmul.f32 %v902, 0.5
      %vm904 = vcmask 7168
      %905 = vst.msk [vmem:[%s4] sm:$0xff] %vm904, %v903
    $region33: #{tpu_custom_call.1} parent=1 // pred_fallthru
      _
    // Predicated region
    $region34: #{tpu_custom_call.1} parent=1 // pred_check
      _
    $region35: #{tpu_custom_call.1} parent=1 // pred_check_branch
      %907 = sbr.rel (0) target = $region37
    $region36: #{tpu_custom_call.1} parent=1 // pred_region
      _
    $region37: #{tpu_custom_call.1} parent=1 // pred_fallthru
      _
    // Predicated region
    $region38: #{tpu_custom_call.1} parent=1 // pred_check
      _
    $region39: #{tpu_custom_call.1} parent=1 // pred_check_branch
      %909 = sbr.rel (0) target = $region41
    $region40: #{tpu_custom_call.1} parent=1 // pred_region
      _
    $region41: #{tpu_custom_call.1} parent=1 // pred_fallthru
      _
    %910 = vsyncpa [#allocation6], 1
    %911 = vsyncpa [#allocation8], 1

</llo_original>
